<compile_context>
chip_gen: v7x
topology: tpu7x:2x2x1
jax: 0.10.0
libtpu: 0.0.40
codegen_flags: <defaults>
</compile_context>

<pallas_src>
import functools
import math

import jax
import jax.numpy as jnp
from jax.experimental import pallas as pl
from jax.experimental.pallas import tpu as pltpu

LANE = 128
# Max block width (lanes) per grid step.  At f32 this is a 4 MiB input block
# (double-buffered -> 8 MiB) plus two full-width f32 accumulators (8 MiB),
# ~16 MiB total -- comfortably inside the 32 MiB scoped-VMEM limit we request.
MAX_TW = 128 * 1024


def _accumulate(x_ref, sum_ref, ssq_ref, shift_ref, *, n_valid, tw, masked):
    """Elementwise (VPU-only) accumulation of one block into lane-wide sums."""
    x = x_ref[...].astype(jnp.float32)                        # (TB, TW)
    shift = jnp.broadcast_to(shift_ref[...], x.shape)         # per-sample shift
    xs = x - shift
    if masked:
        # Final k block may extend past N; zero the invalid columns.
        lane = jax.lax.broadcasted_iota(jnp.int32, x.shape, 1)
        limit = n_valid - pl.program_id(1) * tw                # valid cols here
        xs = jnp.where(lane < limit, xs, 0.0)
    sum_ref[...] += xs
    ssq_ref[...] += xs * xs


def _mean_std_kernel(x_ref, o_ref, sum_ref, ssq_ref, shift_ref, *,
                     n_valid, tw, needs_mask):
    k = pl.program_id(1)
    nk = pl.num_programs(1)

    @pl.when(k == 0)
    def _():
        sum_ref[...] = jnp.zeros_like(sum_ref)
        ssq_ref[...] = jnp.zeros_like(ssq_ref)
        # Shift = first element of each sample (column 0 is always valid).
        first = x_ref[:, 0:LANE].astype(jnp.float32)           # (TB, 128)
        lane0 = jax.lax.broadcasted_iota(jnp.int32, first.shape, 1) == 0
        shift_ref[...] = jnp.sum(jnp.where(lane0, first, 0.0),
                                 axis=-1, keepdims=True)

    acc = functools.partial(_accumulate, x_ref, sum_ref, ssq_ref, shift_ref,
                            n_valid=n_valid, tw=tw)
    if needs_mask:
        @pl.when(k < nk - 1)
        def _():
            acc(masked=False)

        @pl.when(k == nk - 1)
        def _():
            acc(masked=True)
    else:
        acc(masked=False)

    @pl.when(k == nk - 1)
    def _():
        n = jnp.float32(n_valid)
        # Single cross-lane reduction per sample, only at finalize.
        s = jnp.sum(sum_ref[...], axis=-1, keepdims=True)      # (TB, 1)
        q = jnp.sum(ssq_ref[...], axis=-1, keepdims=True)      # (TB, 1)
        mean = shift_ref[...] + s / n
        # One-pass unbiased variance (ddof=1) of the shifted values; clamp tiny
        # negative rounding error.  N == 1 divides by zero -> nan, matching
        # torch.std(unbiased=True) on a single element.
        var = jnp.maximum((q - s * s / n) / (n - 1.0), 0.0)
        o_ref[...] = (mean + jnp.sqrt(var)).astype(o_ref.dtype)


def mean_plus_std_per_sample(x):
    """x: (B, ...) -> (B,) array of mean + std (ddof=1) per sample."""
    B = x.shape[0]
    N = math.prod(x.shape[1:]) if x.ndim > 1 else 1
    xf = x.reshape(B, N)                      # flat view; no explicit padding

    TB = min(B, 8)                            # == B (full dim) or a multiple of 8
    W128 = pl.cdiv(N, LANE) * LANE            # lane-rounded sample width
    TW = min(W128, MAX_TW)                    # block width (multiple of 128)
    nb = pl.cdiv(B, TB)
    nk = pl.cdiv(N, TW)
    needs_mask = (N % TW) != 0

    kernel = functools.partial(_mean_std_kernel, n_valid=N, tw=TW,
                               needs_mask=needs_mask)

    out = pl.pallas_call(
        kernel,
        out_shape=jax.ShapeDtypeStruct((B, 1), x.dtype),
        grid_spec=pltpu.PrefetchScalarGridSpec(
            num_scalar_prefetch=0,
            grid=(nb, nk),
            in_specs=[pl.BlockSpec((TB, TW), lambda b, k: (b, k))],
            out_specs=pl.BlockSpec((TB, 1), lambda b, k: (b, 0)),
            scratch_shapes=[
                pltpu.VMEM((TB, TW), jnp.float32),   # lane-wide running sum
                pltpu.VMEM((TB, TW), jnp.float32),   # lane-wide running sum-of-squares
                pltpu.VMEM((TB, 1), jnp.float32),    # per-sample shift (first element)
            ],
        ),
        compiler_params=pltpu.CompilerParams(
            dimension_semantics=("parallel", "arbitrary"),
            vmem_limit_bytes=32 * 1024 * 1024,
        ),
    )(xf)
    return out[:, 0]


def reference(x):
    # pure-JAX reference matching the PyTorch module
    B = x.shape[0]
    xf = x.reshape(B, -1)
    return jnp.mean(xf, axis=1) + jnp.std(xf, axis=1, ddof=1)


if __name__ == "__main__":
    key = jax.random.PRNGKey(0)
    B, C, H, W = 2, 4, 16, 16
    x = jax.random.normal(key, (B, C, H, W), dtype=jnp.float32)

    result = mean_plus_std_per_sample(x)
    jax.block_until_ready(result)

    ref = reference(x)
    assert jnp.allclose(result, ref, atol=1e-4, rtol=1e-4), (result, ref)

    # The PyTorch module returns a python list of per-sample scalars; mirror that.
    result_list = [result[i] for i in range(B)]
    assert len(result_list) == B

    print("KERNEL_OK")
</pallas_src>

<mosaic_0001>
module attributes {stable_mosaic.version = 11 : i64} {
  func.func @_mean_std_kernel(%arg0: i32, %arg1: i32, %arg2: memref<2x1024xf32, #tpu.memory_space<vmem>>, %arg3: memref<2x1xf32, #tpu.memory_space<vmem>>, %arg4: memref<2x1024xf32, #tpu.memory_space<vmem>>, %arg5: memref<2x1024xf32, #tpu.memory_space<vmem>>, %arg6: memref<2x1xf32, #tpu.memory_space<vmem>>) attributes {dimension_semantics = [#tpu.dimension_semantics<parallel>, #tpu.dimension_semantics<arbitrary>], iteration_bounds = array<i64: 1, 1>, scalar_prefetch = 0 : i64, scratch_operands = 3 : i64, tpu.core_type = #tpu.core_type<tc>, window_params = [{transform_indices = @transform_0, window_bounds = array<i64: 2, 1024>}, {transform_indices = @transform_1, window_bounds = array<i64: 2, 1>}]} {
    %c0_i32 = arith.constant 0 : i32
    %0 = arith.cmpi eq, %arg1, %c0_i32 : i32
    %1 = arith.extui %0 : i1 to i32
    %c0_i32_0 = arith.constant 0 : i32
    %2 = arith.cmpi ne, %1, %c0_i32_0 : i32
    scf.if %2 {
      %cst = arith.constant 0.000000e+00 : f32
      %18 = vector.broadcast %cst : f32 to vector<2x1024xf32>
      %c0_14 = arith.constant 0 : index
      %c0_15 = arith.constant 0 : index
      %19 = vector.load %arg4[%c0_14, %c0_15] : memref<2x1024xf32, #tpu.memory_space<vmem>>, vector<2x1024xf32>
      tpu.vector_store %arg4[%c0_14, %c0_15], %18 {strides = array<i32>} : memref<2x1024xf32, #tpu.memory_space<vmem>>, vector<2x1024xf32>,
      %cst_16 = arith.constant 0.000000e+00 : f32
      %20 = vector.broadcast %cst_16 : f32 to vector<2x1024xf32>
      %c0_17 = arith.constant 0 : index
      %c0_18 = arith.constant 0 : index
      %21 = vector.load %arg5[%c0_17, %c0_18] : memref<2x1024xf32, #tpu.memory_space<vmem>>, vector<2x1024xf32>
      tpu.vector_store %arg5[%c0_17, %c0_18], %20 {strides = array<i32>} : memref<2x1024xf32, #tpu.memory_space<vmem>>, vector<2x1024xf32>,
      %c0_19 = arith.constant 0 : index
      %c0_20 = arith.constant 0 : index
      %22 = vector.load %arg2[%c0_19, %c0_20] : memref<2x1024xf32, #tpu.memory_space<vmem>>, vector<2x128xf32>
      %23 = tpu.iota {dimensions = array<i32: 1>} : vector<2x128xi32>
      %c0_i32_21 = arith.constant 0 : i32
      %24 = vector.broadcast %c0_i32_21 : i32 to vector<2x128xi32>
      %25 = arith.cmpi eq, %23, %24 : vector<2x128xi32>
      %cst_22 = arith.constant 0.000000e+00 : f32
      %26 = vector.broadcast %cst_22 : f32 to vector<2x128xf32>
      %27 = arith.select %25, %22, %26 : vector<2x128xi1>, vector<2x128xf32>
      %cst_23 = arith.constant dense<0.000000e+00> : vector<2xf32>
      %28 = vector.multi_reduction <add>, %27, %cst_23 [1] : vector<2x128xf32> to vector<2xf32>
      %29 = vector.shape_cast %28 : vector<2xf32> to vector<2x1xf32>
      %c0_24 = arith.constant 0 : index
      %c0_25 = arith.constant 0 : index
      %30 = vector.load %arg6[%c0_24, %c0_25] : memref<2x1xf32, #tpu.memory_space<vmem>>, vector<2x1xf32>
      tpu.vector_store %arg6[%c0_24, %c0_25], %29 {strides = array<i32>} : memref<2x1xf32, #tpu.memory_space<vmem>>, vector<2x1xf32>,
    } else {
    }
    %c0 = arith.constant 0 : index
    %c0_1 = arith.constant 0 : index
    %3 = vector.load %arg2[%c0, %c0_1] : memref<2x1024xf32, #tpu.memory_space<vmem>>, vector<2x1024xf32>
    %c0_2 = arith.constant 0 : index
    %c0_3 = arith.constant 0 : index
    %4 = vector.load %arg6[%c0_2, %c0_3] : memref<2x1xf32, #tpu.memory_space<vmem>>, vector<2x1xf32>
    %5 = vector.shape_cast %4 : vector<2x1xf32> to vector<2x1xf32>
    %6 = vector.broadcast %5 : vector<2x1xf32> to vector<2x1024xf32>
    %7 = arith.subf %3, %6 : vector<2x1024xf32>
    %c0_4 = arith.constant 0 : index
    %c0_5 = arith.constant 0 : index
    %8 = vector.load %arg4[%c0_4, %c0_5] : memref<2x1024xf32, #tpu.memory_space<vmem>>, vector<2x1024xf32>
    %9 = arith.addf %8, %7 : vector<2x1024xf32>
    %c0_6 = arith.constant 0 : index
    %c0_7 = arith.constant 0 : index
    %10 = vector.load %arg4[%c0_6, %c0_7] : memref<2x1024xf32, #tpu.memory_space<vmem>>, vector<2x1024xf32>
    tpu.vector_store %arg4[%c0_6, %c0_7], %9 {strides = array<i32>} : memref<2x1024xf32, #tpu.memory_space<vmem>>, vector<2x1024xf32>,
    %c0_8 = arith.constant 0 : index
    %c0_9 = arith.constant 0 : index
    %11 = vector.load %arg5[%c0_8, %c0_9] : memref<2x1024xf32, #tpu.memory_space<vmem>>, vector<2x1024xf32>
    %12 = arith.mulf %7, %7 : vector<2x1024xf32>
    %13 = arith.addf %11, %12 : vector<2x1024xf32>
    %c0_10 = arith.constant 0 : index
    %c0_11 = arith.constant 0 : index
    %14 = vector.load %arg5[%c0_10, %c0_11] : memref<2x1024xf32, #tpu.memory_space<vmem>>, vector<2x1024xf32>
    tpu.vector_store %arg5[%c0_10, %c0_11], %13 {strides = array<i32>} : memref<2x1024xf32, #tpu.memory_space<vmem>>, vector<2x1024xf32>,
    %c0_i32_12 = arith.constant 0 : i32
    %15 = arith.cmpi eq, %arg1, %c0_i32_12 : i32
    %16 = arith.extui %15 : i1 to i32
    %c0_i32_13 = arith.constant 0 : i32
    %17 = arith.cmpi ne, %16, %c0_i32_13 : i32
    scf.if %17 {
      %c0_14 = arith.constant 0 : index
      %c0_15 = arith.constant 0 : index
      %18 = vector.load %arg4[%c0_14, %c0_15] : memref<2x1024xf32, #tpu.memory_space<vmem>>, vector<2x1024xf32>
      %cst = arith.constant dense<0.000000e+00> : vector<2xf32>
      %19 = vector.multi_reduction <add>, %18, %cst [1] : vector<2x1024xf32> to vector<2xf32>
      %20 = vector.shape_cast %19 : vector<2xf32> to vector<2x1xf32>
      %c0_16 = arith.constant 0 : index
      %c0_17 = arith.constant 0 : index
      %21 = vector.load %arg5[%c0_16, %c0_17] : memref<2x1024xf32, #tpu.memory_space<vmem>>, vector<2x1024xf32>
      %cst_18 = arith.constant dense<0.000000e+00> : vector<2xf32>
      %22 = vector.multi_reduction <add>, %21, %cst_18 [1] : vector<2x1024xf32> to vector<2xf32>
      %23 = vector.shape_cast %22 : vector<2xf32> to vector<2x1xf32>
      %c0_19 = arith.constant 0 : index
      %c0_20 = arith.constant 0 : index
      %24 = vector.load %arg6[%c0_19, %c0_20] : memref<2x1xf32, #tpu.memory_space<vmem>>, vector<2x1xf32>
      %cst_21 = arith.constant 1.024000e+03 : f32
      %25 = vector.broadcast %cst_21 : f32 to vector<2x1xf32>
      %26 = arith.divf %20, %25 : vector<2x1xf32>
      %27 = arith.addf %24, %26 : vector<2x1xf32>
      %28 = arith.mulf %20, %20 : vector<2x1xf32>
      %cst_22 = arith.constant 1.024000e+03 : f32
      %29 = vector.broadcast %cst_22 : f32 to vector<2x1xf32>
      %30 = arith.divf %28, %29 : vector<2x1xf32>
      %31 = arith.subf %23, %30 : vector<2x1xf32>
      %cst_23 = arith.constant 1.024000e+03 : f32
      %cst_24 = arith.constant 1.000000e+00 : f32
      %32 = arith.subf %cst_23, %cst_24 : f32
      %33 = vector.broadcast %32 : f32 to vector<2x1xf32>
      %34 = arith.divf %31, %33 : vector<2x1xf32>
      %cst_25 = arith.constant 0.000000e+00 : f32
      %35 = vector.broadcast %cst_25 : f32 to vector<2x1xf32>
      %36 = arith.maximumf %34, %35 : vector<2x1xf32>
      %37 = math.sqrt %36 : vector<2x1xf32>
      %38 = arith.addf %27, %37 : vector<2x1xf32>
      %c0_26 = arith.constant 0 : index
      %c0_27 = arith.constant 0 : index
      %39 = vector.load %arg3[%c0_26, %c0_27] : memref<2x1xf32, #tpu.memory_space<vmem>>, vector<2x1xf32>
      tpu.vector_store %arg3[%c0_26, %c0_27], %38 {strides = array<i32>} : memref<2x1xf32, #tpu.memory_space<vmem>>, vector<2x1xf32>,
    } else {
    }
    return
  }
  func.func @transform_0(%arg0: i32, %arg1: i32) -> (i32, i32) {
    %c0_i32 = arith.constant 0 : i32
    return %arg0, %arg1 : i32, i32
  }
  func.func @transform_1(%arg0: i32, %arg1: i32) -> (i32, i32) {
    %c0_i32 = arith.constant 0 : i32
    %c0_i32_0 = arith.constant 0 : i32
    return %arg0, %c0_i32 : i32, i32
  }
}

</mosaic_0001>

<llo_original>
// kernel: tpu_custom_call.1
$region0: #{tpu_custom_call.1}
  #allocation0 [shape = 'u32[]', space=smem, size = 0x4, offset = 0x4, fixed_abs, tag = 'smem constant byte address 0x4 - core index']
  #allocation1 [shape = 'u32[144,128]{1,0:T(1,128)}', space=vmem, size = 0x12000, scoped, tag = 'internal scratch']
  #allocation2 [shape = 'f32[2,1024]{1,0:T(2,128)}', space=vmem, size = 0x2000, scoped, tag = 'scratch operand']
  #allocation3 [shape = 'f32[2,1024]{1,0:T(2,128)}', space=vmem, size = 0x2000, scoped, tag = 'scratch operand']
  #allocation4 [shape = 'f32[2,1]{1,0:T(2,128)}', space=vmem, size = 0x400, scoped, tag = 'scratch operand']
  %s0 = inlined_call_operand.hbm [shape: f32[2,1024], index: 0, kind: input, shape index: {}]
  %s1 = inlined_call_operand.vmem [shape: f32[2,1], index: 1, kind: output, shape index: {}]
  %s2 = sld [smem:[#allocation0]]
  $region26: #{tpu_custom_call.1} parent=0
    _
  %s4 = ssub.s32 1, %s2
  %s5 = scalar_select 0, %s4, %s2
  $region1: #{tpu_custom_call.1} parent=0
    #allocation5 [shape = 'u8[8192]{0}', space=vmem, size = 0x2000, scoped, tag = 'input window, operand 0, single buffered']
    #allocation6 [shape = 's32[1]{0}', space=sflag, size = 0x4, scoped, tag = 'scoped memory for tpu_custom_call.1']
    %6 = vsyncpa [#allocation6], 0
    // Predicated region
    $region2: #{tpu_custom_call.1} parent=1 // pred_check
      _
    $region3: #{tpu_custom_call.1} parent=1 // pred_check_branch
      %8 = sbr.rel (0) target = $region5
    $region4: #{tpu_custom_call.1} parent=1 // pred_region
      %s10 = ssub.s32 256, 256
      %11 = vsyncadd [#allocation6], %s10
      %s13 = sshll.u32 [#allocation5], 4
      %s14 = int_to_ptr.vmem [resolvable:$true] %s13
      %16 = dma.hbm_to_vmem [thread:$0]  %s0, 256, %s14, [#allocation6]
    $region5: #{tpu_custom_call.1} parent=1 // pred_fallthru
      _
    // Predicated region
    $region6: #{tpu_custom_call.1} parent=1 // pred_check
      _
    $region7: #{tpu_custom_call.1} parent=1 // pred_check_branch
      %18 = sbr.rel (0) target = $region9
    $region8: #{tpu_custom_call.1} parent=1 // pred_region
      %19 = dma.done [#allocation6], 256
    $region9: #{tpu_custom_call.1} parent=1 // pred_fallthru
      _
    %p20 = scmp.eq.s32.totalorder 0, 0
    // Predicated region
    $region10: #{tpu_custom_call.1} parent=1 // pred_check
      %p21 = pneg %p20
    $region11: #{tpu_custom_call.1} parent=1 // pred_check_branch
      %23 = sbr.rel (%p21) target = $region13
    $region12: #{tpu_custom_call.1} parent=1 // pred_region
      %24 = vst [vmem:[#allocation2] sm:$0xff] 0.0
      %25 = vst [vmem:[#allocation2 + $0x8] sm:$0xff] 0.0
      %26 = vst [vmem:[#allocation3] sm:$0xff] 0.0
      %27 = vst [vmem:[#allocation3 + $0x8] sm:$0xff] 0.0
      %v28 = vld [vmem:[#allocation5] sm:$0x3]
      %v29 = vlaneseq
      %v30 = vand.u32 %v29, 127
      %vm31 = vcmp.eq.s32.totalorder %v30, 0
      %v32 = vsel %vm31, %v28, 0.0
      %vm33 = vcmask 1041408
      %v34 = vsel %vm33, %v32, 0.0
      %35 = vadd.xlane.f32.xlu0 %v34
      %v36 = vpop.xlane.xlu0 %35
      %vm37 = vcmask 1024
      %38 = vst.msk [vmem:[#allocation4] sm:$0x3] %vm37, %v36
    $region13: #{tpu_custom_call.1} parent=1 // pred_fallthru
      _
    %v39 = vld [vmem:[#allocation5] sm:$0xff]
    %v40 = vld [vmem:[#allocation5 + $0x8] sm:$0xff]
    %v41 = vld [vmem:[#allocation4] sm:$0x3]
    %43 = vset.pattern.permute.xlu0 0
    %44 = vperm.xlu0 %43, %v41
    %v45 = vpop.permute.xlu0 %44
    %v47 = vunpack.c.l.s4 269488144
    %v48 = vunpack.c.0.s8 %v47
    %v49 = vlaneseq
    %v50 = vshrl.u32 %v49, 7
    %v51 = vsub.s32 %v48, %v50
    %v52 = vrot.slane %v45, %v51
    %v54 = vsub.f32 %v39, %v52
    %v55 = vsub.f32 %v40, %v52
    %v56 = vld [vmem:[#allocation2] sm:$0xff]
    %v57 = vld [vmem:[#allocation2 + $0x8] sm:$0xff]
    %v58 = vadd.f32 %v56, %v54
    %v59 = vadd.f32 %v57, %v55
    %60 = vst [vmem:[#allocation2] sm:$0xff] %v58
    %61 = vst [vmem:[#allocation2 + $0x8] sm:$0xff] %v59
    %v62 = vld [vmem:[#allocation3] sm:$0xff]
    %v63 = vld [vmem:[#allocation3 + $0x8] sm:$0xff]
    %v64 = vmul.f32 %v54, %v54
    %v65 = vmul.f32 %v55, %v55
    %v66 = vadd.f32 %v62, %v64
    %v67 = vadd.f32 %v63, %v65
    %68 = vst [vmem:[#allocation3] sm:$0xff] %v66
    %69 = vst [vmem:[#allocation3 + $0x8] sm:$0xff] %v67
    // Predicated region
    $region14: #{tpu_custom_call.1} parent=1 // pred_check
      %p70 = pneg %p20
    $region15: #{tpu_custom_call.1} parent=1 // pred_check_branch
      %72 = sbr.rel (%p70) target = $region17
    $region16: #{tpu_custom_call.1} parent=1 // pred_region
      %v73 = vld [vmem:[#allocation2] sm:$0xff]
      %v74 = vld [vmem:[#allocation2 + $0x8] sm:$0xff]
      %v77 = vcombine.high %v73, %v73
      %v79 = vunpack.c.l.s4 1983009808
      %v80 = vunpack.c.0.s8 %v79
      %v81 = vlaneseq
      %v82 = vshrl.u32 %v81, 7
      %v83 = vsub.s32 %v80, %v82
      %v84 = vrot.slane %v73, %v83
      %v86 = vunpack.c.l.s4 1983009808
      %v87 = vunpack.c.0.s8 %v86
      %v88 = vlaneseq
      %v89 = vshrl.u32 %v88, 7
      %v90 = vsub.s32 %v87, %v89
      %v91 = vrot.slane %v77, %v90
      %v92 = vcombine.high %v84, %v84
      %v93 = vcombine.high %v91, %v91
      %v94 = vcombine.high %v74, %v74
      %v96 = vunpack.c.l.s4 1983009808
      %v97 = vunpack.c.0.s8 %v96
      %v98 = vlaneseq
      %v99 = vshrl.u32 %v98, 7
      %v100 = vsub.s32 %v97, %v99
      %v101 = vrot.slane %v74, %v100
      %v103 = vunpack.c.l.s4 1983009808
      %v104 = vunpack.c.0.s8 %v103
      %v105 = vlaneseq
      %v106 = vshrl.u32 %v105, 7
      %v107 = vsub.s32 %v104, %v106
      %v108 = vrot.slane %v94, %v107
      %v109 = vcombine.high %v101, %v101
      %v110 = vcombine.high %v108, %v108
      %vm119 = vcmask 1041408
      %v120 = vsel %vm119, %v84, 0.0
      %v121 = vsel %vm119, %v92, 0.0
      %v122 = vadd.f32 %v120, %v121
      %v123 = vsel %vm119, %v91, 0.0
      %v124 = vadd.f32 %v122, %v123
      %v125 = vsel %vm119, %v93, 0.0
      %v126 = vadd.f32 %v124, %v125
      %v127 = vsel %vm119, %v101, 0.0
      %v128 = vadd.f32 %v126, %v127
      %v129 = vsel %vm119, %v109, 0.0
      %v130 = vadd.f32 %v128, %v129
      %v131 = vsel %vm119, %v108, 0.0
      %v132 = vadd.f32 %v130, %v131
      %v133 = vsel %vm119, %v110, 0.0
      %v134 = vadd.f32 %v132, %v133
      %135 = vadd.xlane.f32.xlu0 %v134
      %v136 = vpop.xlane.xlu0 %135
      %v137 = vld [vmem:[#allocation3] sm:$0xff]
      %v138 = vld [vmem:[#allocation3 + $0x8] sm:$0xff]
      %v141 = vcombine.high %v137, %v137
      %v143 = vunpack.c.l.s4 1983009808
      %v144 = vunpack.c.0.s8 %v143
      %v145 = vlaneseq
      %v146 = vshrl.u32 %v145, 7
      %v147 = vsub.s32 %v144, %v146
      %v148 = vrot.slane %v137, %v147
      %v150 = vunpack.c.l.s4 1983009808
      %v151 = vunpack.c.0.s8 %v150
      %v152 = vlaneseq
      %v153 = vshrl.u32 %v152, 7
      %v154 = vsub.s32 %v151, %v153
      %v155 = vrot.slane %v141, %v154
      %v156 = vcombine.high %v148, %v148
      %v157 = vcombine.high %v155, %v155
      %v158 = vcombine.high %v138, %v138
      %v160 = vunpack.c.l.s4 1983009808
      %v161 = vunpack.c.0.s8 %v160
      %v162 = vlaneseq
      %v163 = vshrl.u32 %v162, 7
      %v164 = vsub.s32 %v161, %v163
      %v165 = vrot.slane %v138, %v164
      %v167 = vunpack.c.l.s4 1983009808
      %v168 = vunpack.c.0.s8 %v167
      %v169 = vlaneseq
      %v170 = vshrl.u32 %v169, 7
      %v171 = vsub.s32 %v168, %v170
      %v172 = vrot.slane %v158, %v171
      %v173 = vcombine.high %v165, %v165
      %v174 = vcombine.high %v172, %v172
      %v183 = vsel %vm119, %v148, 0.0
      %v184 = vsel %vm119, %v156, 0.0
      %v185 = vadd.f32 %v183, %v184
      %v186 = vsel %vm119, %v155, 0.0
      %v187 = vadd.f32 %v185, %v186
      %v188 = vsel %vm119, %v157, 0.0
      %v189 = vadd.f32 %v187, %v188
      %v190 = vsel %vm119, %v165, 0.0
      %v191 = vadd.f32 %v189, %v190
      %v192 = vsel %vm119, %v173, 0.0
      %v193 = vadd.f32 %v191, %v192
      %v194 = vsel %vm119, %v172, 0.0
      %v195 = vadd.f32 %v193, %v194
      %v196 = vsel %vm119, %v174, 0.0
      %v197 = vadd.f32 %v195, %v196
      %198 = vadd.xlane.f32.xlu0 %v197
      %v199 = vpop.xlane.xlu0 %198
      %v200 = vld [vmem:[#allocation4] sm:$0x3]
      %v201 = vrcp.pop 1024.0
      %v202 = vmul.f32 %v136, %v201
      %v203 = vadd.f32 %v200, %v202
      %v204 = vmul.f32 %v136, %v136
      %v205 = vmul.f32 %v204, %v201
      %v206 = vsub.f32 %v199, %v205
      %v207 = vrcp.pop 1023.0
      %v208 = vmul.f32 %v206, %v207
      %v209 = vmax.f32 %v208, 0.0
      %v210 = vrsqrt.pop %v209
      %v211 = vmul.f32 %v209, %v210
      %vm212 = vcmp.eq.f32.partialorder %v209, inf
      %v213 = vsel %vm212, %v209, %v211
      %vm214 = vcmp.eq.f32.partialorder %v209, 0.0
      %v215 = vand.u32 %v209, 2147483648
      %v216 = vsel %vm214, %v215, %v213
      %v217 = vadd.f32 %v203, %v216
      %vm218 = vcmask 1024
      %219 = vst.msk [vmem:[%s1] sm:$0x3] %vm218, %v217
    $region17: #{tpu_custom_call.1} parent=1 // pred_fallthru
      _
    // Predicated region
    $region18: #{tpu_custom_call.1} parent=1 // pred_check
      _
    $region19: #{tpu_custom_call.1} parent=1 // pred_check_branch
      %221 = sbr.rel (0) target = $region21
    $region20: #{tpu_custom_call.1} parent=1 // pred_region
      _
    $region21: #{tpu_custom_call.1} parent=1 // pred_fallthru
      _
    // Predicated region
    $region22: #{tpu_custom_call.1} parent=1 // pred_check
      _
    $region23: #{tpu_custom_call.1} parent=1 // pred_check_branch
      %223 = sbr.rel (0) target = $region25
    $region24: #{tpu_custom_call.1} parent=1 // pred_region
      _
    $region25: #{tpu_custom_call.1} parent=1 // pred_fallthru
      _
    %224 = vsyncpa [#allocation6], 1

</llo_original>
